<compile_context>
chip_gen: v7x
topology: tpu7x:2x2x1
jax: 0.10.0
libtpu: 0.0.40
codegen_flags: <defaults>
</compile_context>

<pallas_src>
import functools

import jax
import jax.numpy as jnp
from jax import lax
from jax.experimental import pallas as pl
from jax.experimental.pallas import tpu as pltpu

BN_EPS = 1e-5


def _mix32(x):
    """splitmix32-style uint32 mixer; pure VPU integer ops (portable)."""
    x = x ^ (x >> 16)
    x = x * jnp.uint32(0x7FEB352D)
    x = x ^ (x >> 15)
    x = x * jnp.uint32(0x846CA68B)
    x = x ^ (x >> 16)
    return x


def block_kernel(seed_ref, x_ref, w_ref, gamma_ref, beta_ref, o_ref,
                 *, dropout_p, train, tile_n, total_n):
    # ---- Linear (bias=False): low-precision operands, f32 accumulate (MXU) ----
    y = jnp.dot(x_ref[...], w_ref[...],
                preferred_element_type=jnp.float32)          # [B, TN] f32

    # ---- BatchNorm1d, training mode (batch stats over full batch, biased var) ----
    # TODO(synk): running_mean / running_var buffers are not updated (forward
    # output in training mode is unaffected).
    mean = jnp.mean(y, axis=0, keepdims=True)                # [1, TN]
    var = jnp.mean((y - mean) ** 2, axis=0, keepdims=True)   # [1, TN]
    # Fold gamma/beta + normalization into a single scale/shift per feature.
    scale = gamma_ref[...] * lax.rsqrt(var + BN_EPS)         # [1, TN]
    shift = beta_ref[...] - mean * scale                     # [1, TN]
    y = y * scale + shift

    # ---- ReLU ----
    y = jnp.maximum(y, 0.0)

    # ---- Dropout (train mode): integer-threshold compare on hashed counter ----
    # TODO(synk): Bernoulli(1-p) keep-mask with 1/(1-p) scaling, but not
    # bit-identical to torch's RNG stream.
    if train and dropout_p > 0.0:
        seed_u = seed_ref[0].astype(jnp.uint32)
        col_off = pl.program_id(0).astype(jnp.uint32) * jnp.uint32(tile_n)
        rows = lax.broadcasted_iota(jnp.int32, y.shape, 0).astype(jnp.uint32)
        cols = lax.broadcasted_iota(jnp.int32, y.shape, 1).astype(jnp.uint32)
        ctr = rows * jnp.uint32(total_n) + (cols + col_off)   # global element id
        bits = _mix32(ctr ^ (seed_u * jnp.uint32(0x9E3779B9)))
        thr = jnp.uint32(min(int(round(dropout_p * 2.0 ** 32)), 2 ** 32 - 1))
        keep = bits >= thr                                    # P(keep) = 1 - p
        y = jnp.where(keep, y * (1.0 / (1.0 - dropout_p)), 0.0)

    o_ref[...] = y.astype(o_ref.dtype)


def _pick_tile_n(f_out):
    """Largest lane-dense tile (multiple of 128) that divides F_out."""
    for tn in (512, 256, 128):
        if f_out % tn == 0:
            return tn
    return f_out  # small / irregular F_out: single full tile


def block_forward(x, w_t, gamma, beta, seed, *, dropout_p=0.0, train=True,
                  mxu_dtype=jnp.bfloat16):
    """x: [B, F_in] f32; w_t: [F_in, F_out] f32 (torch weight transposed);
    gamma/beta: [1, F_out] f32; seed: [1] i32."""
    B, F_in = x.shape
    F_out = w_t.shape[1]
    tn = _pick_tile_n(F_out)
    grid = (F_out // tn,)

    # bf16 operands for the MXU (halves weight DMA bytes); f32 accumulation
    # happens inside the kernel via preferred_element_type.
    x_in = x.astype(mxu_dtype)
    w_in = w_t.astype(mxu_dtype)

    kernel = functools.partial(block_kernel,
                               dropout_p=float(dropout_p),
                               train=bool(train),
                               tile_n=int(tn),
                               total_n=int(F_out))

    elem = jnp.dtype(mxu_dtype).itemsize
    # Rough resident set: double-buffered inputs + output tile + params + slack.
    tile_bytes = 2 * (B * F_in * elem + F_in * tn * elem + 2 * tn * 4) \
        + 2 * B * tn * 4
    vmem_limit = int(min(max(4 * tile_bytes, 16 << 20), 96 << 20))

    return pl.pallas_call(
        kernel,
        out_shape=jax.ShapeDtypeStruct((B, F_out), jnp.float32),
        grid_spec=pltpu.PrefetchScalarGridSpec(
            num_scalar_prefetch=1,               # seed -> SMEM
            grid=grid,
            in_specs=[
                pl.BlockSpec((B, F_in), lambda j, seed_ref: (0, 0)),   # x (resident)
                pl.BlockSpec((F_in, tn), lambda j, seed_ref: (0, j)),  # W tile
                pl.BlockSpec((1, tn), lambda j, seed_ref: (0, j)),     # gamma tile
                pl.BlockSpec((1, tn), lambda j, seed_ref: (0, j)),     # beta tile
            ],
            out_specs=pl.BlockSpec((B, tn), lambda j, seed_ref: (0, j)),
        ),
        compiler_params=pltpu.CompilerParams(
            dimension_semantics=("parallel",),   # shard F_out tiles across TCs (v7x)
            vmem_limit_bytes=vmem_limit,
        ),
    )(seed, x_in, w_in, gamma, beta)


if __name__ == "__main__":
    B, F_IN, F_OUT = 8, 32, 256
    DROPOUT = 0.1

    key = jax.random.PRNGKey(0)
    kx, kw = jax.random.split(key)

    # Deterministic inputs / params (torch Linear-style U(-1/sqrt(fan_in), +))
    x = jax.random.normal(kx, (B, F_IN), dtype=jnp.float32)
    bound = 1.0 / (F_IN ** 0.5)
    w = jax.random.uniform(kw, (F_OUT, F_IN), minval=-bound, maxval=bound,
                           dtype=jnp.float32)       # torch layout [out, in]
    w_t = jnp.transpose(w)                          # kernel layout [in, out]
    gamma = jnp.ones((1, F_OUT), jnp.float32)       # BN weight init
    beta = jnp.zeros((1, F_OUT), jnp.float32)       # BN bias init
    seed = jnp.array([0], dtype=jnp.int32)

    out = block_forward(x, w_t, gamma, beta, seed,
                        dropout_p=DROPOUT, train=True)
    jax.block_until_ready(out)
    assert out.shape == (B, F_OUT)
    assert bool(jnp.all(jnp.isfinite(out)))
    print("KERNEL_OK")
</pallas_src>

<mosaic_0001>
module attributes {stable_mosaic.version = 11 : i64} {
  func.func @block_kernel(%arg0: i32, %arg1: memref<1xi32, #tpu.memory_space<smem>>, %arg2: memref<8x32xbf16, #tpu.memory_space<vmem>>, %arg3: memref<32x256xbf16, #tpu.memory_space<vmem>>, %arg4: memref<1x256xf32, #tpu.memory_space<vmem>>, %arg5: memref<1x256xf32, #tpu.memory_space<vmem>>, %arg6: memref<8x256xf32, #tpu.memory_space<vmem>>) attributes {dimension_semantics = [#tpu.dimension_semantics<parallel>], iteration_bounds = array<i64: 1>, scalar_prefetch = 1 : i64, scratch_operands = 0 : i64, tpu.core_type = #tpu.core_type<tc>, window_params = [{pipeline_mode = #tpu.pipeline_mode<synchronous>, transform_indices = @transform_0, window_bounds = array<i64: 8, 32>}, {transform_indices = @transform_1, window_bounds = array<i64: 32, 256>}, {transform_indices = @transform_2, window_bounds = array<i64: 1, 256>}, {transform_indices = @transform_3, window_bounds = array<i64: 1, 256>}, {transform_indices = @transform_4, window_bounds = array<i64: 8, 256>}]} {
    %c0 = arith.constant 0 : index
    %c0_0 = arith.constant 0 : index
    %0 = vector.load %arg2[%c0, %c0_0] : memref<8x32xbf16, #tpu.memory_space<vmem>>, vector<8x32xbf16>
    %c0_1 = arith.constant 0 : index
    %c0_2 = arith.constant 0 : index
    %1 = vector.load %arg3[%c0_1, %c0_2] : memref<32x256xbf16, #tpu.memory_space<vmem>>, vector<32x256xbf16>
    %cst = arith.constant dense<0.000000e+00> : vector<8x256xf32>
    %2 = tpu.matmul %0, %1, %cst {dimension_numbers = #tpu.dot_dimension_numbers<[1], [0], [0], [1], [0, 0, 1, 1], [], []>} : vector<8x32xbf16>, vector<32x256xbf16>, vector<8x256xf32> -> vector<8x256xf32>
    %cst_3 = arith.constant dense<0.000000e+00> : vector<256xf32>
    %3 = vector.multi_reduction <add>, %2, %cst_3 [0] : vector<8x256xf32> to vector<256xf32>
    %4 = vector.shape_cast %3 : vector<256xf32> to vector<1x256xf32>
    %cst_4 = arith.constant 8.000000e+00 : f32
    %5 = vector.broadcast %cst_4 : f32 to vector<1x256xf32>
    %6 = arith.divf %4, %5 : vector<1x256xf32>
    %7 = vector.broadcast %6 : vector<1x256xf32> to vector<8x256xf32>
    %8 = arith.subf %2, %7 : vector<8x256xf32>
    %9 = arith.mulf %8, %8 : vector<8x256xf32>
    %cst_5 = arith.constant dense<0.000000e+00> : vector<256xf32>
    %10 = vector.multi_reduction <add>, %9, %cst_5 [0] : vector<8x256xf32> to vector<256xf32>
    %11 = vector.shape_cast %10 : vector<256xf32> to vector<1x256xf32>
    %cst_6 = arith.constant 8.000000e+00 : f32
    %12 = vector.broadcast %cst_6 : f32 to vector<1x256xf32>
    %13 = arith.divf %11, %12 : vector<1x256xf32>
    %c0_7 = arith.constant 0 : index
    %c0_8 = arith.constant 0 : index
    %14 = vector.load %arg4[%c0_7, %c0_8] : memref<1x256xf32, #tpu.memory_space<vmem>>, vector<1x256xf32>
    %cst_9 = arith.constant 9.99999974E-6 : f32
    %15 = vector.broadcast %cst_9 : f32 to vector<1x256xf32>
    %16 = arith.addf %13, %15 : vector<1x256xf32>
    %17 = math.rsqrt %16 : vector<1x256xf32>
    %18 = arith.mulf %14, %17 : vector<1x256xf32>
    %c0_10 = arith.constant 0 : index
    %c0_11 = arith.constant 0 : index
    %19 = vector.load %arg5[%c0_10, %c0_11] : memref<1x256xf32, #tpu.memory_space<vmem>>, vector<1x256xf32>
    %20 = arith.mulf %6, %18 : vector<1x256xf32>
    %21 = arith.subf %19, %20 : vector<1x256xf32>
    %22 = vector.broadcast %18 : vector<1x256xf32> to vector<8x256xf32>
    %23 = arith.mulf %2, %22 : vector<8x256xf32>
    %24 = vector.broadcast %21 : vector<1x256xf32> to vector<8x256xf32>
    %25 = arith.addf %23, %24 : vector<8x256xf32>
    %cst_12 = arith.constant 0.000000e+00 : f32
    %26 = vector.broadcast %cst_12 : f32 to vector<8x256xf32>
    %27 = arith.maximumf %25, %26 : vector<8x256xf32>
    %c0_13 = arith.constant 0 : index
    %28 = memref.load %arg1[%c0_13] : memref<1xi32, #tpu.memory_space<smem>>
    %c256_i32 = arith.constant 256 : i32
    %29 = arith.muli %arg0, %c256_i32 : i32
    %30 = tpu.iota {dimensions = array<i32: 0>} : vector<8x256xi32>
    %31 = tpu.iota {dimensions = array<i32: 1>} : vector<8x256xi32>
    %c256_i32_14 = arith.constant 256 : i32
    %32 = vector.broadcast %c256_i32_14 : i32 to vector<8x256xi32>
    %33 = arith.muli %30, %32 : vector<8x256xi32>
    %34 = vector.broadcast %29 : i32 to vector<8x256xi32>
    %35 = arith.addi %31, %34 : vector<8x256xi32>
    %36 = arith.addi %33, %35 : vector<8x256xi32>
    %c-1640531527_i32 = arith.constant -1640531527 : i32
    %37 = arith.muli %28, %c-1640531527_i32 : i32
    %38 = vector.broadcast %37 : i32 to vector<8x256xi32>
    %39 = arith.xori %36, %38 : vector<8x256xi32>
    %c16_i32 = arith.constant 16 : i32
    %40 = vector.broadcast %c16_i32 : i32 to vector<8x256xi32>
    %41 = arith.shrui %39, %40 : vector<8x256xi32>
    %42 = arith.xori %39, %41 : vector<8x256xi32>
    %c2146121005_i32 = arith.constant 2146121005 : i32
    %43 = vector.broadcast %c2146121005_i32 : i32 to vector<8x256xi32>
    %44 = arith.muli %42, %43 : vector<8x256xi32>
    %c15_i32 = arith.constant 15 : i32
    %45 = vector.broadcast %c15_i32 : i32 to vector<8x256xi32>
    %46 = arith.shrui %44, %45 : vector<8x256xi32>
    %47 = arith.xori %44, %46 : vector<8x256xi32>
    %c-2073254261_i32 = arith.constant -2073254261 : i32
    %48 = vector.broadcast %c-2073254261_i32 : i32 to vector<8x256xi32>
    %49 = arith.muli %47, %48 : vector<8x256xi32>
    %c16_i32_15 = arith.constant 16 : i32
    %50 = vector.broadcast %c16_i32_15 : i32 to vector<8x256xi32>
    %51 = arith.shrui %49, %50 : vector<8x256xi32>
    %52 = arith.xori %49, %51 : vector<8x256xi32>
    %c429496730_i32 = arith.constant 429496730 : i32
    %53 = vector.broadcast %c429496730_i32 : i32 to vector<8x256xi32>
    %54 = arith.cmpi uge, %52, %53 : vector<8x256xi32>
    %cst_16 = arith.constant 1.11111116 : f32
    %55 = vector.broadcast %cst_16 : f32 to vector<8x256xf32>
    %56 = arith.mulf %27, %55 : vector<8x256xf32>
    %cst_17 = arith.constant 0.000000e+00 : f32
    %57 = vector.broadcast %cst_17 : f32 to vector<8x256xf32>
    %58 = arith.select %54, %56, %57 : vector<8x256xi1>, vector<8x256xf32>
    %c0_18 = arith.constant 0 : index
    %c0_19 = arith.constant 0 : index
    %59 = vector.load %arg6[%c0_18, %c0_19] : memref<8x256xf32, #tpu.memory_space<vmem>>, vector<8x256xf32>
    tpu.vector_store %arg6[%c0_18, %c0_19], %58 {strides = array<i32>} : memref<8x256xf32, #tpu.memory_space<vmem>>, vector<8x256xf32>,
    return
  }
  func.func @transform_0(%arg0: i32, %arg1: memref<1xi32, #tpu.memory_space<smem>>) -> (i32, i32) {
    %c0_i32 = arith.constant 0 : i32
    %c0_i32_0 = arith.constant 0 : i32
    %c0_i32_1 = arith.constant 0 : i32
    return %c0_i32, %c0_i32_0 : i32, i32
  }
  func.func @transform_1(%arg0: i32, %arg1: memref<1xi32, #tpu.memory_space<smem>>) -> (i32, i32) {
    %c0_i32 = arith.constant 0 : i32
    %c0_i32_0 = arith.constant 0 : i32
    return %c0_i32, %arg0 : i32, i32
  }
  func.func @transform_2(%arg0: i32, %arg1: memref<1xi32, #tpu.memory_space<smem>>) -> (i32, i32) {
    %c0_i32 = arith.constant 0 : i32
    %c0_i32_0 = arith.constant 0 : i32
    return %c0_i32, %arg0 : i32, i32
  }
  func.func @transform_3(%arg0: i32, %arg1: memref<1xi32, #tpu.memory_space<smem>>) -> (i32, i32) {
    %c0_i32 = arith.constant 0 : i32
    %c0_i32_0 = arith.constant 0 : i32
    return %c0_i32, %arg0 : i32, i32
  }
  func.func @transform_4(%arg0: i32, %arg1: memref<1xi32, #tpu.memory_space<smem>>) -> (i32, i32) {
    %c0_i32 = arith.constant 0 : i32
    %c0_i32_0 = arith.constant 0 : i32
    return %c0_i32, %arg0 : i32, i32
  }
}

</mosaic_0001>

<llo_original>
// kernel: tpu_custom_call.1
$region0: #{tpu_custom_call.1}
  #allocation0 [shape = 'u32[]', space=smem, size = 0x4, offset = 0x4, fixed_abs, tag = 'smem constant byte address 0x4 - core index']
  #allocation1 [shape = 'u32[144,128]{1,0:T(1,128)}', space=vmem, size = 0x12000, scoped, tag = 'internal scratch']
  #allocation2 [shape = 's32[1]{0}', space=sflag, size = 0x4, scoped, tag = 'scoped memory for tpu_custom_call.1']
  #allocation3 [shape = 's32[1]{0:T(128)S(6)}', space=smem, size = 0x200, scoped, tag = 'prefetched SMEM operand 0']
  %s0 = inlined_call_operand.<no memory space> [shape: s32[1], index: 0, kind: input, shape index: {}]
  %s1 = inlined_call_operand.hbm [shape: bf16[8,32], index: 1, kind: input, shape index: {}]
  %s2 = inlined_call_operand.hbm [shape: bf16[32,256], index: 2, kind: input, shape index: {}]
  %s3 = inlined_call_operand.vmem [shape: f32[1,256], index: 3, kind: input, shape index: {}]
  %s4 = inlined_call_operand.vmem [shape: f32[1,256], index: 4, kind: input, shape index: {}]
  %s5 = inlined_call_operand.hbm [shape: f32[8,256], index: 5, kind: output, shape index: {}]
  %s6 = sld [smem:[#allocation0]]
  $region34: #{tpu_custom_call.1} parent=0
    _
  %s8 = ssub.s32 1, %s6
  %s9 = scalar_select 0, %s8, %s6
  %10 = sst [smem:[#allocation3]] %s0
  $region1: #{tpu_custom_call.1} parent=0
    #allocation4 [shape = 'u8[2048]{0}', space=vmem, size = 0x800, scoped, tag = 'input window, operand 1, single buffered']
    #allocation5 [shape = 's32[1]{0}', space=sflag, size = 0x4, scoped, tag = 'scoped memory for tpu_custom_call.1']
    #allocation6 [shape = 's32[1]{0}', space=sflag, size = 0x4, scoped, tag = 'scoped memory for tpu_custom_call.1']
    #allocation7 [shape = 'u8[16384]{0}', space=vmem, size = 0x4000, scoped, tag = 'input window, operand 2, single buffered']
    #allocation8 [shape = 's32[1]{0}', space=sflag, size = 0x4, scoped, tag = 'scoped memory for tpu_custom_call.1']
    #allocation9 [shape = 'u8[8192]{0}', space=vmem, size = 0x2000, scoped, tag = 'output window, operand 0, single buffered']
    %11 = vsyncpa [#allocation5], 0
    %12 = vsyncpa [#allocation8], 0
    %13 = vsyncpa [#allocation6], 0
    // Predicated region
    $region2: #{tpu_custom_call.1} parent=1 // pred_check
      _
    $region3: #{tpu_custom_call.1} parent=1 // pred_check_branch
      %15 = sbr.rel (0) target = $region5
    $region4: #{tpu_custom_call.1} parent=1 // pred_region
      %s17 = ssub.s32 64, 64
      %18 = vsyncadd [#allocation5], %s17
      %s20 = sshll.u32 [#allocation4], 4
      %s21 = int_to_ptr.vmem [resolvable:$true] %s20
      %23 = dma.hbm_to_vmem [thread:$0]  %s1, 64, %s21, [#allocation5]
    $region5: #{tpu_custom_call.1} parent=1 // pred_fallthru
      _
    // Predicated region
    $region6: #{tpu_custom_call.1} parent=1 // pred_check
      _
    $region7: #{tpu_custom_call.1} parent=1 // pred_check_branch
      %25 = sbr.rel (0) target = $region9
    $region8: #{tpu_custom_call.1} parent=1 // pred_region
      %s27 = ssub.s32 512, 512
      %28 = vsyncadd [#allocation8], %s27
      %s29 = sshll.u32 [#allocation7], 4
      %s30 = int_to_ptr.vmem [resolvable:$true] %s29
      %35 = dma.hbm_to_vmem [thread:$0]  %s2, 512, %s30, [#allocation8], 128, 128, 8
    $region9: #{tpu_custom_call.1} parent=1 // pred_fallthru
      _
    // Predicated region
    $region10: #{tpu_custom_call.1} parent=1 // pred_check
      _
    $region11: #{tpu_custom_call.1} parent=1 // pred_check_branch
      %37 = sbr.rel (0) target = $region13
    $region12: #{tpu_custom_call.1} parent=1 // pred_region
      _
    $region13: #{tpu_custom_call.1} parent=1 // pred_fallthru
      _
    // Predicated region
    $region14: #{tpu_custom_call.1} parent=1 // pred_check
      _
    $region15: #{tpu_custom_call.1} parent=1 // pred_check_branch
      %39 = sbr.rel (0) target = $region17
    $region16: #{tpu_custom_call.1} parent=1 // pred_region
      _
    $region17: #{tpu_custom_call.1} parent=1 // pred_fallthru
      _
    // Predicated region
    $region18: #{tpu_custom_call.1} parent=1 // pred_check
      _
    $region19: #{tpu_custom_call.1} parent=1 // pred_check_branch
      %41 = sbr.rel (0) target = $region21
    $region20: #{tpu_custom_call.1} parent=1 // pred_region
      %42 = dma.done [#allocation5], 64
    $region21: #{tpu_custom_call.1} parent=1 // pred_fallthru
      _
    // Predicated region
    $region22: #{tpu_custom_call.1} parent=1 // pred_check
      _
    $region23: #{tpu_custom_call.1} parent=1 // pred_check_branch
      %44 = sbr.rel (0) target = $region25
    $region24: #{tpu_custom_call.1} parent=1 // pred_region
      %45 = dma.done [#allocation8], 512
    $region25: #{tpu_custom_call.1} parent=1 // pred_fallthru
      _
    %v47 = vld [vmem:[#allocation4] sm:$0xf]
    %v48 = vld [vmem:[#allocation7] sm:$0xff]
    %v49 = vld [vmem:[#allocation7 + $0x8] sm:$0xff]
    %v50 = vld [vmem:[#allocation7 + $0x10] sm:$0xff]
    %v51 = vld [vmem:[#allocation7 + $0x18] sm:$0xff]
    %v56 = vunpack.c.l.b16 %v48
    %v57 = vunpack.c.h.b16 %v48
    %v58 = vunpack.c.l.b16 %v49
    %v59 = vunpack.c.h.b16 %v49
    %v60 = vunpack.c.l.b16 %v50
    %v61 = vunpack.c.h.b16 %v50
    %v62 = vunpack.c.l.b16 %v51
    %v63 = vunpack.c.h.b16 %v51
    %v64 = vpack.c.b16 %v58, %v56
    %v65 = vpack.c.b16 %v59, %v57
    %v66 = vpack.c.b16 %v62, %v60
    %v67 = vpack.c.b16 %v63, %v61
    %vm72 = vcmask 261120
    %v74 = vsel %vm72, %v47, 0
    %76 = vmatprep.subr.bf16.mxu0 %v65
    %77 = vmatpush1.bf16.msra.mxu0 %v64
    %78 = vmatprep.subr.bf16.mxu0 %v67
    %79 = vmatpush1.bf16.msra.mxu0 %v66
    %80 = vmatprep.subr.bf16.mxu0 0
    %81 = vmatpush1.bf16.msra.mxu0 0
    %82 = vmatprep.subr.bf16.mxu0 0
    %83 = vmatpush1.bf16.msra.mxu0 0
    %84 = vmatprep.subr.bf16.mxu0 0
    %85 = vmatpush1.bf16.msra.mxu0 0
    %86 = vmatprep.subr.bf16.mxu0 0
    %87 = vmatpush1.bf16.msra.mxu0 0
    %88 = vmatprep.subr.bf16.mxu0 0
    %89 = vmatpush1.bf16.msra.mxu0 0
    %90 = vmatprep.subr.bf16.mxu0 0
    %91 = vmatpush1.bf16.msra.mxu0 0
    %92 = vmatprep.subr.bf16.mxu0 0
    %93 = vmatpush1.bf16.msra.mxu0 0
    %94 = vmatprep.subr.bf16.mxu0 0
    %95 = vmatpush1.bf16.msra.mxu0 0
    %96 = vmatprep.subr.bf16.mxu0 0
    %97 = vmatpush1.bf16.msra.mxu0 0
    %98 = vmatprep.subr.bf16.mxu0 0
    %99 = vmatpush1.bf16.msra.mxu0 0
    %100 = vmatprep.subr.bf16.mxu0 0
    %101 = vmatpush1.bf16.msra.mxu0 0
    %102 = vmatprep.subr.bf16.mxu0 0
    %103 = vmatpush1.bf16.msra.mxu0 0
    %104 = vmatprep.subr.bf16.mxu0 0
    %105 = vmatpush1.bf16.msra.mxu0 0
    %106 = vmatprep.subr.bf16.mxu0 0
    %107 = vmatpush1.bf16.msra.mxu0 0
    %108 = vmatprep.mubr.bf16.mxu0 0
    %109 = vmatmul.mubr.bf16.gmra.mrb[0].mxu0 %v74
    %v110 = vpop.f32.mrb[0].mxu0
    %v111 = vadd.f32 0.0, %v110
    %v112 = vpop.f32.mrb[0].mxu0
    %v113 = vadd.f32 0.0, %v112
    %v114 = vpop.f32.mrb[0].mxu0
    %v115 = vpop.f32.mrb[0].mxu0
    %116 = vdwg.mxu0
    %v117 = vrot.slane %v111, 4
    %v118 = vadd.f32 %v111, %v117
    %v119 = vrot.slane %v118, 2
    %v120 = vadd.f32 %v118, %v119
    %v121 = vrot.slane %v120, 1
    %v122 = vadd.f32 %v120, %v121
    %v123 = vrot.slane %v113, 4
    %v124 = vadd.f32 %v113, %v123
    %v125 = vrot.slane %v124, 2
    %v126 = vadd.f32 %v124, %v125
    %v127 = vrot.slane %v126, 1
    %v128 = vadd.f32 %v126, %v127
    %v129 = vrcp.pop 8.0
    %v130 = vmul.f32 %v122, %v129
    %v131 = vmul.f32 %v128, %v129
    %v132 = vsub.f32 %v111, %v130
    %v133 = vsub.f32 %v113, %v131
    %v134 = vmul.f32 %v132, %v132
    %v135 = vmul.f32 %v133, %v133
    %v136 = vrot.slane %v134, 4
    %v137 = vadd.f32 %v134, %v136
    %v138 = vrot.slane %v137, 2
    %v139 = vadd.f32 %v137, %v138
    %v140 = vrot.slane %v139, 1
    %v141 = vadd.f32 %v139, %v140
    %v142 = vrot.slane %v135, 4
    %v143 = vadd.f32 %v135, %v142
    %v144 = vrot.slane %v143, 2
    %v145 = vadd.f32 %v143, %v144
    %v146 = vrot.slane %v145, 1
    %v147 = vadd.f32 %v145, %v146
    %v148 = vmul.f32 %v141, %v129
    %v149 = vmul.f32 %v147, %v129
    %v150 = vld [vmem:[%s3] sm:$0x3]
    %v151 = vadd.f32 %v148, 1e-05
    %v152 = vadd.f32 %v149, 1e-05
    %v153 = vrsqrt.pop %v151
    %v154 = vrsqrt.pop %v152
    %v157 = vcombine.low %v153, %v154
    %v159 = vunpack.c.l.s4 1966171168
    %v160 = vunpack.c.0.s8 %v159
    %v161 = vlaneseq
    %v162 = vshrl.u32 %v161, 7
    %v163 = vsub.s32 %v160, %v162
    %v164 = vrot.slane %v157, %v163
    %v166 = vunpack.c.l.s4 1966171168
    %v167 = vunpack.c.0.s8 %v166
    %v168 = vlaneseq
    %v169 = vshrl.u32 %v168, 7
    %v170 = vsub.s32 %v167, %v169
    %v171 = vrot.slane %v164, %v170
    %v173 = vmul.f32 %v150, %v171
    %v174 = vld [vmem:[%s4] sm:$0x3]
    %v176 = vlaneseq
    %v177 = vshrl.u32 %v176, 7
    %v178 = vsub.s32 0, %v177
    %v179 = vrot.slane %v173, %v178
    %v180 = vlaneseq
    %v181 = vshrl.u32 %v180, 7
    %v182 = vsub.s32 1, %v181
    %v183 = vrot.slane %v173, %v182
    %v186 = vmul.f32 %v130, %v179
    %v187 = vmul.f32 %v131, %v183
    %v190 = vcombine.low %v186, %v187
    %v192 = vunpack.c.l.s4 1966171168
    %v193 = vunpack.c.0.s8 %v192
    %v194 = vlaneseq
    %v195 = vshrl.u32 %v194, 7
    %v196 = vsub.s32 %v193, %v195
    %v197 = vrot.slane %v190, %v196
    %v199 = vunpack.c.l.s4 1966171168
    %v200 = vunpack.c.0.s8 %v199
    %v201 = vlaneseq
    %v202 = vshrl.u32 %v201, 7
    %v203 = vsub.s32 %v200, %v202
    %v204 = vrot.slane %v197, %v203
    %v206 = vsub.f32 %v174, %v204
    %v207 = vmul.f32 %v111, %v179
    %v208 = vmul.f32 %v113, %v183
    %v210 = vlaneseq
    %v211 = vshrl.u32 %v210, 7
    %v212 = vsub.s32 0, %v211
    %v213 = vrot.slane %v206, %v212
    %v214 = vlaneseq
    %v215 = vshrl.u32 %v214, 7
    %v216 = vsub.s32 1, %v215
    %v217 = vrot.slane %v206, %v216
    %v220 = vadd.f32 %v207, %v213
    %v221 = vadd.f32 %v208, %v217
    %v222 = vmax.f32 %v220, 0.0
    %v223 = vmax.f32 %v221, 0.0
    %s224 = sld [smem:[#allocation3]]
    %s225 = smul.u32 0, 256
    %v226 = vlaneseq
    %v227 = vshrl.u32 %v226, 7
    %v228 = vlaneseq
    %v229 = vand.u32 %v228, 127
    %v230 = vadd.s32 %v229, 128
    %v231 = vmul.u32 %v227, 256
    %v232 = vstv %s225
    %v233 = vadd.s32 %v229, %v232
    %v234 = vadd.s32 %v230, %v232
    %v235 = vadd.s32 %v231, %v233
    %v236 = vadd.s32 %v231, %v234
    %s237 = smul.u32 %s224, 2654435769
    %v238 = vstv %s237
    %v239 = vxor.u32 %v235, %v238
    %v240 = vxor.u32 %v236, %v238
    %v241 = vshrl.u32 %v239, 16
    %v242 = vshrl.u32 %v240, 16
    %v243 = vxor.u32 %v239, %v241
    %v244 = vxor.u32 %v240, %v242
    %v245 = vmul.u32 %v243, 2146121005
    %v246 = vmul.u32 %v244, 2146121005
    %v247 = vshrl.u32 %v245, 15
    %v248 = vshrl.u32 %v246, 15
    %v249 = vxor.u32 %v245, %v247
    %v250 = vxor.u32 %v246, %v248
    %v251 = vmul.u32 %v249, 2221713035
    %v252 = vmul.u32 %v250, 2221713035
    %v253 = vshrl.u32 %v251, 16
    %v254 = vshrl.u32 %v252, 16
    %v255 = vxor.u32 %v251, %v253
    %v256 = vxor.u32 %v252, %v254
    %vm257 = vcmp.ge.u32.totalorder %v255, 429496730
    %vm258 = vcmp.ge.u32.totalorder %v256, 429496730
    %v259 = vmul.f32 %v222, 1.1111112
    %v260 = vmul.f32 %v223, 1.1111112
    %v261 = vsel %vm257, %v259, 0.0
    %v262 = vsel %vm258, %v260, 0.0
    %263 = vst [vmem:[#allocation9] sm:$0xff] %v261
    %264 = vst [vmem:[#allocation9 + $0x8] sm:$0xff] %v262
    // Predicated region
    $region26: #{tpu_custom_call.1} parent=1 // pred_check
      _
    $region27: #{tpu_custom_call.1} parent=1 // pred_check_branch
      %266 = sbr.rel (0) target = $region29
    $region28: #{tpu_custom_call.1} parent=1 // pred_region
      %s268 = ssub.s32 256, 256
      %269 = vsyncadd [#allocation6], %s268
      %s271 = sshll.u32 [#allocation9], 4
      %s272 = int_to_ptr.vmem [resolvable:$true] %s271
      %274 = dma.vmem_to_hbm [thread:$0]  %s272, 256, %s5, [#allocation6]
    $region29: #{tpu_custom_call.1} parent=1 // pred_fallthru
      _
    // Predicated region
    $region30: #{tpu_custom_call.1} parent=1 // pred_check
      _
    $region31: #{tpu_custom_call.1} parent=1 // pred_check_branch
      %276 = sbr.rel (0) target = $region33
    $region32: #{tpu_custom_call.1} parent=1 // pred_region
      %277 = dma.done [#allocation6], 256
    $region33: #{tpu_custom_call.1} parent=1 // pred_fallthru
      _
    %278 = vsyncpa [#allocation5], 1
    %279 = vsyncpa [#allocation8], 1
    %280 = vsyncpa [#allocation6], 1

</llo_original>
